<compile_context>
chip_gen: v7x
topology: tpu7x:2x2x1
jax: 0.10.0
libtpu: 0.0.40
codegen_flags: <defaults>
</compile_context>

<pallas_src>
import jax
import jax.numpy as jnp
from jax.experimental import pallas as pl
from jax.experimental.pallas import tpu as pltpu


def _uwl_kernel(losses_ref, log_vars_ref, total_ref, precision_ref):
    # losses_ref / log_vars_ref: (1, T) f32 in VMEM (already cast in wrapper).
    losses = losses_ref[...]                     # single tiny vld
    log_vars = log_vars_ref[...]                 # single tiny vld
    precision = jnp.exp(-log_vars)               # EUP transcendental
    per_task = precision * losses + log_vars     # VPU elementwise
    total_ref[0, 0] = jnp.sum(per_task)          # XLU reduce -> 4 B SMEM store
    precision_ref[...] = precision               # saved for the backward pass


def _uwl_impl(losses_vec, log_vars):
    if losses_vec.shape != log_vars.shape:
        raise ValueError(
            f"losses {losses_vec.shape} and log_vars {log_vars.shape} must match")
    t = losses_vec.shape[0]
    # Single f32 cast + trivial (T,)->(1,T) reshape per input; no concat op.
    losses2d = losses_vec.astype(jnp.float32).reshape(1, t)
    log_vars2d = log_vars.astype(jnp.float32).reshape(1, t)

    total, precision = pl.pallas_call(
        _uwl_kernel,
        out_shape=(
            jax.ShapeDtypeStruct((1, 1), jnp.float32),   # scalar total
            jax.ShapeDtypeStruct((1, t), jnp.float32),   # exp(-log_vars)
        ),
        # Gridless: full-extent arrays, explicit memory spaces, no index_maps.
        in_specs=[
            pl.BlockSpec(memory_space=pltpu.MemorySpace.VMEM),
            pl.BlockSpec(memory_space=pltpu.MemorySpace.VMEM),
        ],
        out_specs=(
            pl.BlockSpec(memory_space=pltpu.MemorySpace.SMEM),
            pl.BlockSpec(memory_space=pltpu.MemorySpace.VMEM),
        ),
        # Tell XLA this custom call is essentially free.
        cost_estimate=pl.CostEstimate(
            flops=3 * t, transcendentals=t, bytes_accessed=12 * t + 4),
    )(losses2d, log_vars2d)
    return total[0, 0], precision[0]


@jax.custom_vjp
def uncertainty_weighted_loss(losses_vec, log_vars):
    """losses_vec: (T,) per-task scalar losses (dict iteration order).
       log_vars:   (T,) learnable parameter (zeros at init).
       Returns scalar total loss (float32)."""
    total, _ = _uwl_impl(losses_vec, log_vars)
    return total


def _uwl_fwd(losses_vec, log_vars):
    total, precision = _uwl_impl(losses_vec, log_vars)
    # Reuse the kernel's exp(-log_vars) in the backward (no extra exp dispatch).
    return total, (losses_vec, log_vars, precision)


def _uwl_bwd(residuals, g):
    losses_vec, log_vars, precision = residuals
    lo = losses_vec.astype(jnp.float32)
    d_losses = (g * precision).astype(losses_vec.dtype)                 # d/d loss_i
    d_log_vars = (g * (1.0 - precision * lo)).astype(log_vars.dtype)    # d/d lv_i
    return d_losses, d_log_vars


uncertainty_weighted_loss.defvjp(_uwl_fwd, _uwl_bwd)


if __name__ == "__main__":
    # Module setup: task_names determines the parameter shape; log_vars init to
    # zeros, exactly as nn.Parameter(torch.zeros(len(task_names))).
    task_names = ["cls", "reg", "seg", "aux"]
    num_tasks = len(task_names)
    log_vars_init = jnp.zeros((num_tasks,), dtype=jnp.float32)

    key = jax.random.PRNGKey(0)
    k_loss, k_lv = jax.random.split(key)
    # Deterministic example per-task scalar losses (what `losses.values()` yields).
    losses_vec = jax.random.uniform(k_loss, (num_tasks,), dtype=jnp.float32) * 2.0
    # Also exercise non-trivial log_vars so the exp path is actually tested.
    log_vars_trained = jax.random.normal(k_lv, (num_tasks,), dtype=jnp.float32) * 0.5

    ok = True
    for lv in (log_vars_init, log_vars_trained):
        total = jax.block_until_ready(uncertainty_weighted_loss(losses_vec, lv))
        ref = jnp.sum(jnp.exp(-lv) * losses_vec + lv)
        ok &= bool(jnp.allclose(total, ref, rtol=1e-5, atol=1e-5))

        # Gradient check (custom_vjp: analytic backward reusing kernel's exp).
        g_losses, g_log_vars = jax.grad(
            uncertainty_weighted_loss, argnums=(0, 1))(losses_vec, lv)
        g_losses = jax.block_until_ready(g_losses)
        ref_g_losses = jnp.exp(-lv)
        ref_g_log_vars = 1.0 - jnp.exp(-lv) * losses_vec
        ok &= bool(jnp.allclose(g_losses, ref_g_losses, rtol=1e-5, atol=1e-5))
        ok &= bool(jnp.allclose(g_log_vars, ref_g_log_vars, rtol=1e-5, atol=1e-5))

    assert ok, "UncertaintyWeightedLoss Pallas kernel mismatch vs jnp reference"
    print("KERNEL_OK")
</pallas_src>

<mosaic_0001>
module attributes {stable_mosaic.version = 11 : i64} {
  func.func @_uwl_kernel(%arg0: memref<1x4xf32, #tpu.memory_space<vmem>>, %arg1: memref<1x4xf32, #tpu.memory_space<vmem>>, %arg2: memref<1x1xf32, #tpu.memory_space<smem>>, %arg3: memref<1x4xf32, #tpu.memory_space<vmem>>) attributes {dimension_semantics = [], scalar_prefetch = 0 : i64, scratch_operands = 0 : i64, tpu.core_type = #tpu.core_type<tc>} {
    %c0 = arith.constant 0 : index
    %c0_0 = arith.constant 0 : index
    %0 = vector.load %arg0[%c0, %c0_0] : memref<1x4xf32, #tpu.memory_space<vmem>>, vector<1x4xf32>
    %c0_1 = arith.constant 0 : index
    %c0_2 = arith.constant 0 : index
    %1 = vector.load %arg1[%c0_1, %c0_2] : memref<1x4xf32, #tpu.memory_space<vmem>>, vector<1x4xf32>
    %cst = arith.constant 0.000000e+00 : f32
    %2 = vector.broadcast %cst : f32 to vector<1x4xf32>
    %3 = arith.subf %2, %1 : vector<1x4xf32>
    %4 = math.exp %3 : vector<1x4xf32>
    %5 = arith.mulf %4, %0 : vector<1x4xf32>
    %6 = arith.addf %5, %1 : vector<1x4xf32>
    %7 = vector.shape_cast %6 : vector<1x4xf32> to vector<1x1x4xf32>
    %cst_3 = arith.constant dense<0.000000e+00> : vector<1xf32>
    %8 = vector.multi_reduction <add>, %7, %cst_3 [1, 2] : vector<1x1x4xf32> to vector<1xf32>
    %9 = vector.shape_cast %8 : vector<1xf32> to vector<1x1x1xf32>
    %10 = vector.extract %9[0, 0, 0] : f32 from vector<1x1x1xf32>
    %c0_4 = arith.constant 0 : index
    %c0_5 = arith.constant 0 : index
    %11 = memref.load %arg2[%c0_4, %c0_5] : memref<1x1xf32, #tpu.memory_space<smem>>
    memref.store %10, %arg2[%c0_4, %c0_5] : memref<1x1xf32, #tpu.memory_space<smem>>
    %c0_6 = arith.constant 0 : index
    %c0_7 = arith.constant 0 : index
    %12 = vector.load %arg3[%c0_6, %c0_7] : memref<1x4xf32, #tpu.memory_space<vmem>>, vector<1x4xf32>
    tpu.vector_store %arg3[%c0_6, %c0_7], %4 {strides = array<i32>} : memref<1x4xf32, #tpu.memory_space<vmem>>, vector<1x4xf32>,
    return
  }
}

</mosaic_0001>

<llo_original>
// kernel: tpu_custom_call.1
$region0: #{tpu_custom_call.1}
  #allocation0 [shape = 'u32[]', space=smem, size = 0x4, offset = 0x4, fixed_abs, tag = 'smem constant byte address 0x4 - core index']
  #allocation1 [shape = 'u32[144,128]{1,0:T(1,128)}', space=vmem, size = 0x12000, scoped, tag = 'internal scratch']
  %s0 = inlined_call_operand.hbm [shape: f32[1,4], index: 0, kind: input, shape index: {}]
  %s1 = inlined_call_operand.vmem [shape: f32[1,4], index: 1, kind: input, shape index: {}]
  %s2 = inlined_call_operand.hbm [shape: f32[1,1], index: 2, kind: output, shape index: {0}]
  %s3 = inlined_call_operand.hbm [shape: f32[1,4], index: 3, kind: output, shape index: {1}]
  %4 = xla_tuple %s2, %s3
  %s5 = sld [smem:[#allocation0]]
  $region30: #{tpu_custom_call.1} parent=0
    _
  %s7 = ssub.s32 1, %s5
  %s8 = scalar_select 0, %s7, %s5
  $region1: #{tpu_custom_call.1} parent=0
    #allocation2 [shape = 'u8[512]{0}', space=vmem, size = 0x400, scoped, tag = 'input window, operand 0, single buffered']
    #allocation3 [shape = 's32[1]{0}', space=sflag, size = 0x4, scoped, tag = 'scoped memory for tpu_custom_call.1']
    #allocation4 [shape = 's32[1]{0}', space=sflag, size = 0x4, scoped, tag = 'scoped memory for tpu_custom_call.1']
    #allocation5 [shape = 's32[1]{0}', space=sflag, size = 0x4, scoped, tag = 'scoped memory for tpu_custom_call.1']
    #allocation6 [shape = 'u8[512]{0}', space=smem, size = 0x200, scoped, tag = 'output window, operand 0, single buffered']
    #allocation7 [shape = 'u8[512]{0}', space=vmem, size = 0x400, scoped, tag = 'output window, operand 1, single buffered']
    %9 = vsyncpa [#allocation3], 0
    %10 = vsyncpa [#allocation5], 0
    %11 = vsyncpa [#allocation4], 0
    // Predicated region
    $region2: #{tpu_custom_call.1} parent=1 // pred_check
      _
    $region3: #{tpu_custom_call.1} parent=1 // pred_check_branch
      %13 = sbr.rel (0) target = $region5
    $region4: #{tpu_custom_call.1} parent=1 // pred_region
      %s15 = ssub.s32 16, 16
      %16 = vsyncadd [#allocation3], %s15
      %s18 = sshll.u32 [#allocation2], 4
      %s19 = int_to_ptr.vmem [resolvable:$true] %s18
      %21 = dma.hbm_to_vmem [thread:$0]  %s0, 16, %s19, [#allocation3]
    $region5: #{tpu_custom_call.1} parent=1 // pred_fallthru
      _
    // Predicated region
    $region6: #{tpu_custom_call.1} parent=1 // pred_check
      _
    $region7: #{tpu_custom_call.1} parent=1 // pred_check_branch
      %23 = sbr.rel (0) target = $region9
    $region8: #{tpu_custom_call.1} parent=1 // pred_region
      _
    $region9: #{tpu_custom_call.1} parent=1 // pred_fallthru
      _
    // Predicated region
    $region10: #{tpu_custom_call.1} parent=1 // pred_check
      _
    $region11: #{tpu_custom_call.1} parent=1 // pred_check_branch
      %25 = sbr.rel (0) target = $region13
    $region12: #{tpu_custom_call.1} parent=1 // pred_region
      %26 = dma.done [#allocation3], 16
    $region13: #{tpu_custom_call.1} parent=1 // pred_fallthru
      _
    %v27 = vld [vmem:[#allocation2] sm:$0x1]
    %v28 = vld [vmem:[%s1] sm:$0x1]
    %v29 = vsub.f32 0.0, %v28
    %v30 = vmul.f32 %v29, 1.442695
    %v31 = vpow.pop %v30
    %v32 = vmul.f32 %v31, %v27
    %v33 = vadd.f32 %v32, %v28
    %vm34 = vcmask 24576
    %v35 = vsel %vm34, %v33, 0.0
    %36 = vadd.xlane.f32.xlu0 %v35
    %v37 = vpop.xlane.xlu0 %36
    %v38 = vrot.slane %v37, 4
    %v39 = vadd.f32 %v37, %v38
    %v40 = vrot.slane %v39, 2
    %v41 = vadd.f32 %v39, %v40
    %v42 = vrot.slane %v41, 1
    %v43 = vadd.f32 %v41, %v42
    %s44 = vtos %v43
    %s45 = scalar_lea.smem [#allocation6], 0
    %46 = sst [smem:[%s45]] %s44
    %47 = vst.msk [vmem:[#allocation7] sm:$0x1] %vm34, %v31
    // Predicated region
    $region14: #{tpu_custom_call.1} parent=1 // pred_check
      _
    $region15: #{tpu_custom_call.1} parent=1 // pred_check_branch
      %49 = sbr.rel (0) target = $region17
    $region16: #{tpu_custom_call.1} parent=1 // pred_region
      %s51 = ssub.s32 16, 16
      %52 = vsyncadd [#allocation5], %s51
      %55 = dma.smem_to_hbm [#allocation6], 16, %s2, [#allocation5]
    $region17: #{tpu_custom_call.1} parent=1 // pred_fallthru
      _
    // Predicated region
    $region18: #{tpu_custom_call.1} parent=1 // pred_check
      _
    $region19: #{tpu_custom_call.1} parent=1 // pred_check_branch
      %57 = sbr.rel (0) target = $region21
    $region20: #{tpu_custom_call.1} parent=1 // pred_region
      %s59 = ssub.s32 16, 16
      %60 = vsyncadd [#allocation4], %s59
      %s62 = sshll.u32 [#allocation7], 4
      %s63 = int_to_ptr.vmem [resolvable:$true] %s62
      %65 = dma.vmem_to_hbm [thread:$0]  %s63, 16, %s3, [#allocation4]
    $region21: #{tpu_custom_call.1} parent=1 // pred_fallthru
      _
    // Predicated region
    $region22: #{tpu_custom_call.1} parent=1 // pred_check
      _
    $region23: #{tpu_custom_call.1} parent=1 // pred_check_branch
      %67 = sbr.rel (0) target = $region25
    $region24: #{tpu_custom_call.1} parent=1 // pred_region
      %68 = dma.done [#allocation5], 16
    $region25: #{tpu_custom_call.1} parent=1 // pred_fallthru
      _
    // Predicated region
    $region26: #{tpu_custom_call.1} parent=1 // pred_check
      _
    $region27: #{tpu_custom_call.1} parent=1 // pred_check_branch
      %70 = sbr.rel (0) target = $region29
    $region28: #{tpu_custom_call.1} parent=1 // pred_region
      %71 = dma.done [#allocation4], 16
    $region29: #{tpu_custom_call.1} parent=1 // pred_fallthru
      _
    %72 = sfence
    %73 = vsyncpa [#allocation3], 1
    %74 = vsyncpa [#allocation4], 1
    %75 = vsyncpa [#allocation5], 1

</llo_original>
